<compile_context>
chip_gen: v7x
topology: tpu7x:2x2x1
jax: 0.10.0
libtpu: 0.0.40
codegen_flags: <defaults>
</compile_context>

<pallas_src>
import functools

import jax
import jax.numpy as jnp
from jax.experimental import pallas as pl
from jax.experimental.pallas import tpu as pltpu


_INV_SQRT2 = 0.7071067811865476


def _erf(x):
    # Abramowitz & Stegun 7.1.26 polynomial erf, |err| <= 1.5e-7 (f32 precision).
    # TODO(synk): replace with lax.erf if/when Mosaic guarantees an erf lowering.
    a1, a2, a3, a4, a5 = 0.254829592, -0.284496736, 1.421413741, -1.453152027, 1.061405429
    p = 0.3275911
    sgn = jnp.where(x >= 0.0, 1.0, -1.0)
    ax = jnp.abs(x)
    t = 1.0 / (1.0 + p * ax)
    poly = ((((a5 * t + a4) * t + a3) * t + a2) * t + a1) * t
    y = 1.0 - poly * jnp.exp(-ax * ax)
    return sgn * y


def _gelu_exact(x):
    # nn.GELU() default (erf-based) semantics.
    return 0.5 * x * (1.0 + _erf(x * _INV_SQRT2))


def _reweight_kernel(win_ref, ker_ref, p_ref, out_ref, *, win_num, dim, kk, inv_hw):
    W, D = win_num, dim
    G, H4 = W * D, 4 * W
    Bt = win_ref.shape[0]
    GKK = G * kk

    # AdaptiveAvgPool2d((1,1)) == mean over spatial (lane) axis; XLU reduction on a
    # dense (Bt, G, hw) slab, scaled by the compile-time constant 1/hw.
    x = win_ref[...].astype(jnp.float32)                        # (Bt, G, HW)
    pooled = jnp.sum(x, axis=-1) * inv_hw                       # (Bt, G)

    # Parameters (single packed, grid-resident slab; all slices are static).
    dcw = p_ref[0:1, :G]                                        # (1, G)
    dcb = p_ref[1:2, :W]                                        # (1, W)
    w1 = p_ref[2:2 + H4, :W]                                    # (H4, W)
    b1 = p_ref[2 + H4:3 + H4, :H4]                              # (1, H4)
    w2 = p_ref[3 + H4:3 + H4 + W, :H4]                          # (W, H4)
    b2 = p_ref[3 + H4 + W:4 + H4 + W, :W]                       # (1, W)

    # downchannel: Conv2d(W*D -> W, 1x1, groups=W) on the pooled 1x1 maps:
    # elementwise mul + per-group lane sums (static slices, no MXU, no reshape).
    prod = pooled * dcw                                         # (Bt, G)
    g_cols = []
    for w in range(W):
        seg = prod[:, w * D:(w + 1) * D]                        # (Bt, D)
        g_cols.append(jnp.sum(seg, axis=-1, keepdims=True))     # (Bt, 1)
    g = jnp.concatenate(g_cols, axis=-1) + dcb                  # (Bt, W)

    # linear1 -> GELU -> linear2 -> sigmoid.  (~64 MACs each: VPU broadcast-mul + sum;
    # an MXU push/drain for a (16,4)@(4,Bt) tile would be pure latency here.)
    h = jnp.sum(g[:, None, :] * w1[None, :, :], axis=-1) + b1   # (Bt, H4)
    h = _gelu_exact(h)
    o = jnp.sum(h[:, None, :] * w2[None, :, :], axis=-1) + b2   # (Bt, W)
    w_sig = jax.nn.sigmoid(o)                                   # (Bt, W)

    # Broadcast each window's weight across its dim*k*k lanes using compares + selects
    # (no in-kernel reshape / gather), then rescale the depthwise kernels.
    ker = ker_ref[...].astype(jnp.float32)                      # (Bt, GKK)
    lane = jax.lax.broadcasted_iota(jnp.int32, (Bt, GKK), 1)
    dkk = D * kk
    scale = jnp.zeros((Bt, GKK), jnp.float32)
    for w in range(W):
        in_grp = (lane >= w * dkk) & (lane < (w + 1) * dkk)
        scale = jnp.where(in_grp, w_sig[:, w:w + 1], scale)
    out_ref[...] = (scale * ker).astype(out_ref.dtype)


def _pack_params(params, *, dim, win_num):
    """Pack all six parameter tensors into one small f32 slab (rows, width)."""
    W, D = win_num, dim
    G, H4 = W * D, 4 * W
    width = max(G, H4, W)
    rows = 4 + H4 + W
    p = jnp.zeros((rows, width), jnp.float32)
    p = p.at[0, :G].set(params["dc_w"].reshape(G).astype(jnp.float32))
    p = p.at[1, :W].set(params["dc_b"].reshape(W).astype(jnp.float32))
    p = p.at[2:2 + H4, :W].set(params["w1"].astype(jnp.float32))
    p = p.at[2 + H4, :H4].set(params["b1"].reshape(H4).astype(jnp.float32))
    p = p.at[3 + H4:3 + H4 + W, :H4].set(params["w2"].astype(jnp.float32))
    p = p.at[3 + H4 + W, :W].set(params["b2"].reshape(W).astype(jnp.float32))
    return p


def _choose_block_b(B, *, bytes_per_item):
    # Keep double-buffered in/out blocks comfortably under the default scoped VMEM
    # (safe on v7x's 32 MiB scoped / 64 MiB physical budget as well as v5e/v6e).
    budget = 16 * 1024 * 1024
    cap = max(1, budget // (2 * bytes_per_item))
    bt = int(min(B, cap, 512))
    # If a large batch would collapse to a single grid step, split it so the
    # ("parallel",) batch axis can still shard across 2 TensorCores (v7x megacore).
    if B >= 16 and -(-B // bt) < 2:
        bt = -(-B // 2)
    return bt


def win_kernel_reweight(kernels, windows, params, *, dim, win_num, block_b=None):
    """kernels: (B*win_num*dim, 1, k, k);  windows: (B, win_num*dim, wh, ww)."""
    B, C, Hs, Ws = windows.shape
    assert C == win_num * dim
    kh, kw = int(kernels.shape[-2]), int(kernels.shape[-1])
    kk = kh * kw
    hw = Hs * Ws
    G = win_num * dim
    GKK = G * kk

    # Lane-/sublane-dense slabs (pure wrapper-side layout plumbing, no compute):
    #   windows -> (B, G, hw)     kernels / output -> (B, G*kk)
    # TODO(synk): the whole windows read exists only to produce win_num scalars per batch
    # element; fusing the spatial pooling into the producer of `windows` would remove
    # nearly all of this kernel's HBM traffic.
    win_r = windows.reshape(B, G, hw)
    ker_r = kernels.reshape(B, GKK)
    pslab = _pack_params(params, dim=dim, win_num=win_num)

    if block_b is None:
        bytes_per_item = (max(windows.dtype.itemsize, 1) * G * hw
                          + 2 * max(kernels.dtype.itemsize, 1) * GKK)
        block_b = _choose_block_b(B, bytes_per_item=bytes_per_item)
    bt = int(block_b)
    grid = (pl.cdiv(B, bt),)

    out = pl.pallas_call(
        functools.partial(_reweight_kernel, win_num=win_num, dim=dim, kk=kk,
                          inv_hw=1.0 / hw),
        out_shape=jax.ShapeDtypeStruct((B, GKK), kernels.dtype),
        grid=grid,
        in_specs=[
            pl.BlockSpec((bt, G, hw), lambda b: (b, 0, 0)),   # windows slab
            pl.BlockSpec((bt, GKK), lambda b: (b, 0)),        # kernels slab (lane-dense)
            pl.BlockSpec(pslab.shape, lambda b: (0, 0)),      # packed params (resident)
        ],
        out_specs=pl.BlockSpec((bt, GKK), lambda b: (b, 0)),  # lane-dense output slab
        compiler_params=pltpu.CompilerParams(dimension_semantics=("parallel",)),
    )(win_r, ker_r, pslab)

    # reshape(-1, 1, k, k) as in the torch module
    return out.reshape(-1, 1, kh, kw)


def init_params(key, dim, win_num):
    k0, k1, k2, k3, k4, k5 = jax.random.split(key, 6)
    s = 0.1
    return {
        # Conv2d(win_num*dim, win_num, 1, groups=win_num): weight (win_num, dim, 1, 1)
        "dc_w": s * jax.random.normal(k0, (win_num, dim), jnp.float32),
        "dc_b": s * jax.random.normal(k1, (win_num, 1), jnp.float32),
        # Conv2d(win_num, 4*win_num, 1): weight (4*win_num, win_num, 1, 1)
        "w1": s * jax.random.normal(k2, (4 * win_num, win_num), jnp.float32),
        "b1": s * jax.random.normal(k3, (4 * win_num, 1), jnp.float32),
        # Conv2d(4*win_num, win_num, 1): weight (win_num, 4*win_num, 1, 1)
        "w2": s * jax.random.normal(k4, (win_num, 4 * win_num), jnp.float32),
        "b2": s * jax.random.normal(k5, (win_num, 1), jnp.float32),
    }


def _reference(kernels, windows, params, *, dim, win_num):
    """Pure-JAX reference mirroring the torch forward."""
    B = windows.shape[0]
    kh, kw = kernels.shape[-2], kernels.shape[-1]
    pooled = jnp.mean(windows.astype(jnp.float32), axis=(2, 3))         # (B, C)
    pooled = pooled.reshape(B, win_num, dim)
    g = jnp.einsum("bwd,wd->bw", pooled, params["dc_w"]) + params["dc_b"][:, 0]
    h = g @ params["w1"].T + params["b1"][:, 0]
    h = jax.nn.gelu(h, approximate=False)
    o = h @ params["w2"].T + params["b2"][:, 0]
    w = jax.nn.sigmoid(o)                                               # (B, win_num)
    ker = kernels.reshape(B, win_num, dim, kh * kw).astype(jnp.float32)
    out = w[:, :, None, None] * ker
    return out.reshape(-1, 1, kh, kw).astype(kernels.dtype)


if __name__ == "__main__":
    B, dim, win_num = 2, 4, 4
    wh = ww = 16
    ksz = 3

    key = jax.random.PRNGKey(0)
    kp, kw_, kk_ = jax.random.split(key, 3)

    params = init_params(kp, dim, win_num)
    windows = jax.random.normal(kw_, (B, win_num * dim, wh, ww), jnp.float32)
    # torch reshape(B, win_num, dim, 1, k, k) implies kernels has B*win_num*dim rows
    kernels = jax.random.normal(kk_, (B * win_num * dim, 1, ksz, ksz), jnp.float32)

    fn = jax.jit(functools.partial(win_kernel_reweight, dim=dim, win_num=win_num))
    out = fn(kernels, windows, params)
    jax.block_until_ready(out)

    assert out.shape == (B * win_num * dim, 1, ksz, ksz)
    assert out.dtype == jnp.float32

    ref = _reference(kernels, windows, params, dim=dim, win_num=win_num)
    max_err = float(jnp.max(jnp.abs(out - ref)))
    assert max_err < 1e-3, f"mismatch vs reference: {max_err}"

    print("KERNEL_OK")
</pallas_src>

<mosaic_0001>
module attributes {stable_mosaic.version = 11 : i64} {
  func.func @_reweight_kernel(%arg0: i32, %arg1: memref<2x16x256xf32, #tpu.memory_space<vmem>>, %arg2: memref<2x144xf32, #tpu.memory_space<vmem>>, %arg3: memref<24x16xf32, #tpu.memory_space<vmem>>, %arg4: memref<2x144xf32, #tpu.memory_space<vmem>>) attributes {dimension_semantics = [#tpu.dimension_semantics<parallel>], iteration_bounds = array<i64: 1>, scalar_prefetch = 0 : i64, scratch_operands = 0 : i64, tpu.core_type = #tpu.core_type<tc>, window_params = [{transform_indices = @transform_0, window_bounds = array<i64: 2, 16, 256>}, {transform_indices = @transform_1, window_bounds = array<i64: 2, 144>}, {pipeline_mode = #tpu.pipeline_mode<synchronous>, transform_indices = @transform_2, window_bounds = array<i64: 24, 16>}, {transform_indices = @transform_3, window_bounds = array<i64: 2, 144>}]} {
    %c0 = arith.constant 0 : index
    %c0_0 = arith.constant 0 : index
    %c0_1 = arith.constant 0 : index
    %0 = vector.load %arg1[%c0, %c0_0, %c0_1] : memref<2x16x256xf32, #tpu.memory_space<vmem>>, vector<2x16x256xf32>
    %cst = arith.constant dense<0.000000e+00> : vector<2x16xf32>
    %1 = vector.multi_reduction <add>, %0, %cst [2] : vector<2x16x256xf32> to vector<2x16xf32>
    %cst_2 = arith.constant 3.906250e-03 : f32
    %2 = vector.broadcast %cst_2 : f32 to vector<2x16xf32>
    %3 = arith.mulf %1, %2 : vector<2x16xf32>
    %c0_3 = arith.constant 0 : index
    %c0_4 = arith.constant 0 : index
    %4 = vector.load %arg3[%c0_3, %c0_4] : memref<24x16xf32, #tpu.memory_space<vmem>>, vector<1x16xf32>
    %c1 = arith.constant 1 : index
    %c0_5 = arith.constant 0 : index
    %5 = vector.load %arg3[%c1, %c0_5] : memref<24x16xf32, #tpu.memory_space<vmem>>, vector<1x4xf32>
    %c2 = arith.constant 2 : index
    %c0_6 = arith.constant 0 : index
    %6 = vector.load %arg3[%c2, %c0_6] : memref<24x16xf32, #tpu.memory_space<vmem>>, vector<16x4xf32>
    %c18 = arith.constant 18 : index
    %c0_7 = arith.constant 0 : index
    %7 = vector.load %arg3[%c18, %c0_7] : memref<24x16xf32, #tpu.memory_space<vmem>>, vector<1x16xf32>
    %c19 = arith.constant 19 : index
    %c0_8 = arith.constant 0 : index
    %8 = vector.load %arg3[%c19, %c0_8] : memref<24x16xf32, #tpu.memory_space<vmem>>, vector<4x16xf32>
    %c23 = arith.constant 23 : index
    %c0_9 = arith.constant 0 : index
    %9 = vector.load %arg3[%c23, %c0_9] : memref<24x16xf32, #tpu.memory_space<vmem>>, vector<1x4xf32>
    %10 = vector.broadcast %4 : vector<1x16xf32> to vector<2x16xf32>
    %11 = arith.mulf %3, %10 : vector<2x16xf32>
    %12 = vector.extract_strided_slice %11 {offsets = [0, 0], sizes = [2, 4], strides = [1, 1]} : vector<2x16xf32> to vector<2x4xf32>
    %cst_10 = arith.constant dense<0.000000e+00> : vector<2xf32>
    %13 = vector.multi_reduction <add>, %12, %cst_10 [1] : vector<2x4xf32> to vector<2xf32>
    %14 = vector.shape_cast %13 : vector<2xf32> to vector<2x1xf32>
    %15 = vector.extract_strided_slice %11 {offsets = [0, 4], sizes = [2, 4], strides = [1, 1]} : vector<2x16xf32> to vector<2x4xf32>
    %cst_11 = arith.constant dense<0.000000e+00> : vector<2xf32>
    %16 = vector.multi_reduction <add>, %15, %cst_11 [1] : vector<2x4xf32> to vector<2xf32>
    %17 = vector.shape_cast %16 : vector<2xf32> to vector<2x1xf32>
    %18 = vector.extract_strided_slice %11 {offsets = [0, 8], sizes = [2, 4], strides = [1, 1]} : vector<2x16xf32> to vector<2x4xf32>
    %cst_12 = arith.constant dense<0.000000e+00> : vector<2xf32>
    %19 = vector.multi_reduction <add>, %18, %cst_12 [1] : vector<2x4xf32> to vector<2xf32>
    %20 = vector.shape_cast %19 : vector<2xf32> to vector<2x1xf32>
    %21 = vector.extract_strided_slice %11 {offsets = [0, 12], sizes = [2, 4], strides = [1, 1]} : vector<2x16xf32> to vector<2x4xf32>
    %cst_13 = arith.constant dense<0.000000e+00> : vector<2xf32>
    %22 = vector.multi_reduction <add>, %21, %cst_13 [1] : vector<2x4xf32> to vector<2xf32>
    %23 = vector.shape_cast %22 : vector<2xf32> to vector<2x1xf32>
    %24 = tpu.concatenate %14, %17, %20, %23 in 1 : vector<2x1xf32>, vector<2x1xf32>, vector<2x1xf32>, vector<2x1xf32> -> vector<2x4xf32>
    %25 = vector.broadcast %5 : vector<1x4xf32> to vector<2x4xf32>
    %26 = arith.addf %24, %25 : vector<2x4xf32>
    %27 = vector.shape_cast %26 : vector<2x4xf32> to vector<2x1x4xf32>
    %28 = vector.shape_cast %6 : vector<16x4xf32> to vector<1x16x4xf32>
    %29 = vector.broadcast %27 : vector<2x1x4xf32> to vector<2x16x4xf32>
    %30 = vector.broadcast %28 : vector<1x16x4xf32> to vector<2x16x4xf32>
    %31 = arith.mulf %29, %30 : vector<2x16x4xf32>
    %cst_14 = arith.constant dense<0.000000e+00> : vector<2x16xf32>
    %32 = vector.multi_reduction <add>, %31, %cst_14 [2] : vector<2x16x4xf32> to vector<2x16xf32>
    %33 = vector.broadcast %7 : vector<1x16xf32> to vector<2x16xf32>
    %34 = arith.addf %32, %33 : vector<2x16xf32>
    %cst_15 = arith.constant 5.000000e-01 : f32
    %35 = vector.broadcast %cst_15 : f32 to vector<2x16xf32>
    %36 = arith.mulf %35, %34 : vector<2x16xf32>
    %cst_16 = arith.constant 0.707106769 : f32
    %37 = vector.broadcast %cst_16 : f32 to vector<2x16xf32>
    %38 = arith.mulf %34, %37 : vector<2x16xf32>
    %cst_17 = arith.constant 0.000000e+00 : f32
    %39 = vector.broadcast %cst_17 : f32 to vector<2x16xf32>
    %40 = arith.cmpf oge, %38, %39 : vector<2x16xf32>
    %cst_18 = arith.constant 1.000000e+00 : f32
    %cst_19 = arith.constant -1.000000e+00 : f32
    %41 = vector.broadcast %cst_18 : f32 to vector<2x16xf32>
    %42 = vector.broadcast %cst_19 : f32 to vector<2x16xf32>
    %43 = arith.select %40, %41, %42 : vector<2x16xi1>, vector<2x16xf32>
    %44 = math.absf %38 : vector<2x16xf32>
    %cst_20 = arith.constant 0.327591091 : f32
    %45 = vector.broadcast %cst_20 : f32 to vector<2x16xf32>
    %46 = arith.mulf %45, %44 : vector<2x16xf32>
    %cst_21 = arith.constant 1.000000e+00 : f32
    %47 = vector.broadcast %cst_21 : f32 to vector<2x16xf32>
    %48 = arith.addf %47, %46 : vector<2x16xf32>
    %cst_22 = arith.constant 1.000000e+00 : f32
    %49 = vector.broadcast %cst_22 : f32 to vector<2x16xf32>
    %50 = arith.divf %49, %48 : vector<2x16xf32>
    %cst_23 = arith.constant 1.06140542 : f32
    %51 = vector.broadcast %cst_23 : f32 to vector<2x16xf32>
    %52 = arith.mulf %51, %50 : vector<2x16xf32>
    %cst_24 = arith.constant -1.45315206 : f32
    %53 = vector.broadcast %cst_24 : f32 to vector<2x16xf32>
    %54 = arith.addf %52, %53 : vector<2x16xf32>
    %55 = arith.mulf %54, %50 : vector<2x16xf32>
    %cst_25 = arith.constant 1.42141378 : f32
    %56 = vector.broadcast %cst_25 : f32 to vector<2x16xf32>
    %57 = arith.addf %55, %56 : vector<2x16xf32>
    %58 = arith.mulf %57, %50 : vector<2x16xf32>
    %cst_26 = arith.constant -0.284496725 : f32
    %59 = vector.broadcast %cst_26 : f32 to vector<2x16xf32>
    %60 = arith.addf %58, %59 : vector<2x16xf32>
    %61 = arith.mulf %60, %50 : vector<2x16xf32>
    %cst_27 = arith.constant 0.254829586 : f32
    %62 = vector.broadcast %cst_27 : f32 to vector<2x16xf32>
    %63 = arith.addf %61, %62 : vector<2x16xf32>
    %64 = arith.mulf %63, %50 : vector<2x16xf32>
    %cst_28 = arith.constant 0.000000e+00 : f32
    %65 = vector.broadcast %cst_28 : f32 to vector<2x16xf32>
    %66 = arith.subf %65, %44 : vector<2x16xf32>
    %67 = arith.mulf %66, %44 : vector<2x16xf32>
    %68 = math.exp %67 : vector<2x16xf32>
    %69 = arith.mulf %64, %68 : vector<2x16xf32>
    %cst_29 = arith.constant 1.000000e+00 : f32
    %70 = vector.broadcast %cst_29 : f32 to vector<2x16xf32>
    %71 = arith.subf %70, %69 : vector<2x16xf32>
    %72 = arith.mulf %43, %71 : vector<2x16xf32>
    %cst_30 = arith.constant 1.000000e+00 : f32
    %73 = vector.broadcast %cst_30 : f32 to vector<2x16xf32>
    %74 = arith.addf %73, %72 : vector<2x16xf32>
    %75 = arith.mulf %36, %74 : vector<2x16xf32>
    %76 = vector.shape_cast %75 : vector<2x16xf32> to vector<2x1x16xf32>
    %77 = vector.shape_cast %8 : vector<4x16xf32> to vector<1x4x16xf32>
    %78 = vector.broadcast %76 : vector<2x1x16xf32> to vector<2x4x16xf32>
    %79 = vector.broadcast %77 : vector<1x4x16xf32> to vector<2x4x16xf32>
    %80 = arith.mulf %78, %79 : vector<2x4x16xf32>
    %cst_31 = arith.constant dense<0.000000e+00> : vector<2x4xf32>
    %81 = vector.multi_reduction <add>, %80, %cst_31 [2] : vector<2x4x16xf32> to vector<2x4xf32>
    %82 = vector.broadcast %9 : vector<1x4xf32> to vector<2x4xf32>
    %83 = arith.addf %81, %82 : vector<2x4xf32>
    %84 = arith.negf %83 : vector<2x4xf32>
    %85 = math.exp %84 : vector<2x4xf32>
    %cst_32 = arith.constant 1.000000e+00 : f32
    %86 = vector.broadcast %cst_32 : f32 to vector<2x4xf32>
    %87 = arith.addf %86, %85 : vector<2x4xf32>
    %88 = arith.divf %86, %87 : vector<2x4xf32>
    %c0_33 = arith.constant 0 : index
    %c0_34 = arith.constant 0 : index
    %89 = vector.load %arg2[%c0_33, %c0_34] : memref<2x144xf32, #tpu.memory_space<vmem>>, vector<2x144xf32>
    %90 = tpu.iota {dimensions = array<i32: 1>} : vector<2x144xi32>
    %cst_35 = arith.constant 0.000000e+00 : f32
    %91 = vector.broadcast %cst_35 : f32 to vector<2x144xf32>
    %c0_i32 = arith.constant 0 : i32
    %92 = vector.broadcast %c0_i32 : i32 to vector<2x144xi32>
    %93 = arith.cmpi sge, %90, %92 : vector<2x144xi32>
    %c36_i32 = arith.constant 36 : i32
    %94 = vector.broadcast %c36_i32 : i32 to vector<2x144xi32>
    %95 = arith.cmpi slt, %90, %94 : vector<2x144xi32>
    %96 = arith.andi %93, %95 : vector<2x144xi1>
    %97 = vector.extract_strided_slice %88 {offsets = [0, 0], sizes = [2, 1], strides = [1, 1]} : vector<2x4xf32> to vector<2x1xf32>
    %98 = vector.shape_cast %97 : vector<2x1xf32> to vector<2x1xf32>
    %99 = vector.broadcast %98 : vector<2x1xf32> to vector<2x144xf32>
    %100 = arith.select %96, %99, %91 : vector<2x144xi1>, vector<2x144xf32>
    %c36_i32_36 = arith.constant 36 : i32
    %101 = vector.broadcast %c36_i32_36 : i32 to vector<2x144xi32>
    %102 = arith.cmpi sge, %90, %101 : vector<2x144xi32>
    %c72_i32 = arith.constant 72 : i32
    %103 = vector.broadcast %c72_i32 : i32 to vector<2x144xi32>
    %104 = arith.cmpi slt, %90, %103 : vector<2x144xi32>
    %105 = arith.andi %102, %104 : vector<2x144xi1>
    %106 = vector.extract_strided_slice %88 {offsets = [0, 1], sizes = [2, 1], strides = [1, 1]} : vector<2x4xf32> to vector<2x1xf32>
    %107 = vector.shape_cast %106 : vector<2x1xf32> to vector<2x1xf32>
    %108 = vector.broadcast %107 : vector<2x1xf32> to vector<2x144xf32>
    %109 = arith.select %105, %108, %100 : vector<2x144xi1>, vector<2x144xf32>
    %c72_i32_37 = arith.constant 72 : i32
    %110 = vector.broadcast %c72_i32_37 : i32 to vector<2x144xi32>
    %111 = arith.cmpi sge, %90, %110 : vector<2x144xi32>
    %c108_i32 = arith.constant 108 : i32
    %112 = vector.broadcast %c108_i32 : i32 to vector<2x144xi32>
    %113 = arith.cmpi slt, %90, %112 : vector<2x144xi32>
    %114 = arith.andi %111, %113 : vector<2x144xi1>
    %115 = vector.extract_strided_slice %88 {offsets = [0, 2], sizes = [2, 1], strides = [1, 1]} : vector<2x4xf32> to vector<2x1xf32>
    %116 = vector.shape_cast %115 : vector<2x1xf32> to vector<2x1xf32>
    %117 = vector.broadcast %116 : vector<2x1xf32> to vector<2x144xf32>
    %118 = arith.select %114, %117, %109 : vector<2x144xi1>, vector<2x144xf32>
    %c108_i32_38 = arith.constant 108 : i32
    %119 = vector.broadcast %c108_i32_38 : i32 to vector<2x144xi32>
    %120 = arith.cmpi sge, %90, %119 : vector<2x144xi32>
    %c144_i32 = arith.constant 144 : i32
    %121 = vector.broadcast %c144_i32 : i32 to vector<2x144xi32>
    %122 = arith.cmpi slt, %90, %121 : vector<2x144xi32>
    %123 = arith.andi %120, %122 : vector<2x144xi1>
    %124 = vector.extract_strided_slice %88 {offsets = [0, 3], sizes = [2, 1], strides = [1, 1]} : vector<2x4xf32> to vector<2x1xf32>
    %125 = vector.shape_cast %124 : vector<2x1xf32> to vector<2x1xf32>
    %126 = vector.broadcast %125 : vector<2x1xf32> to vector<2x144xf32>
    %127 = arith.select %123, %126, %118 : vector<2x144xi1>, vector<2x144xf32>
    %128 = arith.mulf %127, %89 : vector<2x144xf32>
    %c0_39 = arith.constant 0 : index
    %c0_40 = arith.constant 0 : index
    %129 = vector.load %arg4[%c0_39, %c0_40] : memref<2x144xf32, #tpu.memory_space<vmem>>, vector<2x144xf32>
    tpu.vector_store %arg4[%c0_39, %c0_40], %128 {strides = array<i32>} : memref<2x144xf32, #tpu.memory_space<vmem>>, vector<2x144xf32>,
    return
  }
  func.func @transform_0(%arg0: i32) -> (i32, i32, i32) {
    %c0_i32 = arith.constant 0 : i32
    %c0_i32_0 = arith.constant 0 : i32
    %c0_i32_1 = arith.constant 0 : i32
    return %arg0, %c0_i32, %c0_i32_0 : i32, i32, i32
  }
  func.func @transform_1(%arg0: i32) -> (i32, i32) {
    %c0_i32 = arith.constant 0 : i32
    %c0_i32_0 = arith.constant 0 : i32
    return %arg0, %c0_i32 : i32, i32
  }
  func.func @transform_2(%arg0: i32) -> (i32, i32) {
    %c0_i32 = arith.constant 0 : i32
    %c0_i32_0 = arith.constant 0 : i32
    %c0_i32_1 = arith.constant 0 : i32
    return %c0_i32, %c0_i32_0 : i32, i32
  }
  func.func @transform_3(%arg0: i32) -> (i32, i32) {
    %c0_i32 = arith.constant 0 : i32
    %c0_i32_0 = arith.constant 0 : i32
    return %arg0, %c0_i32 : i32, i32
  }
}

</mosaic_0001>

<llo_original>
// kernel: win_kernel_reweight.1
$region0: #{win_kernel_reweight.1}
  #allocation0 [shape = 'u32[]', space=smem, size = 0x4, offset = 0x4, fixed_abs, tag = 'smem constant byte address 0x4 - core index']
  #allocation1 [shape = 'u32[144,128]{1,0:T(1,128)}', space=vmem, size = 0x12000, scoped, tag = 'internal scratch']
  %s0 = inlined_call_operand.vmem [shape: f32[2,16,256], index: 0, kind: input, shape index: {}]
  %s1 = inlined_call_operand.vmem [shape: f32[2,144], index: 1, kind: input, shape index: {}]
  %s2 = inlined_call_operand.vmem [shape: f32[24,16], index: 2, kind: input, shape index: {}]
  %s3 = inlined_call_operand.vmem [shape: f32[2,144], index: 3, kind: output, shape index: {}]
  %s4 = sld [smem:[#allocation0]]
  $region22: #{win_kernel_reweight.1} parent=0
    _
  %s6 = ssub.s32 1, %s4
  %s7 = scalar_select 0, %s6, %s4
  // Predicated region
  $region2: #{win_kernel_reweight.1} parent=0 // pred_check
    _
  $region3: #{win_kernel_reweight.1} parent=0 // pred_check_branch
    %9 = sbr.rel (0) target = $region5
  $region4: #{win_kernel_reweight.1} parent=0 // pred_region
    _
  $region5: #{win_kernel_reweight.1} parent=0 // pred_fallthru
    _
  // Predicated region
  $region6: #{win_kernel_reweight.1} parent=0 // pred_check
    _
  $region7: #{win_kernel_reweight.1} parent=0 // pred_check_branch
    %11 = sbr.rel (0) target = $region9
  $region8: #{win_kernel_reweight.1} parent=0 // pred_region
    _
  $region9: #{win_kernel_reweight.1} parent=0 // pred_fallthru
    _
  // Predicated region
  $region10: #{win_kernel_reweight.1} parent=0 // pred_check
    _
  $region11: #{win_kernel_reweight.1} parent=0 // pred_check_branch
    %13 = sbr.rel (0) target = $region13
  $region12: #{win_kernel_reweight.1} parent=0 // pred_region
    _
  $region13: #{win_kernel_reweight.1} parent=0 // pred_fallthru
    _
  %v14 = vld [vmem:[%s0] sm:$0xff]
  %v15 = vld [vmem:[%s0 + $0x8] sm:$0xff]
  %v16 = vld [vmem:[%s0 + $0x10] sm:$0xff]
  %v17 = vld [vmem:[%s0 + $0x18] sm:$0xff]
  %v18 = vld [vmem:[%s0 + $0x20] sm:$0xff]
  %v19 = vld [vmem:[%s0 + $0x28] sm:$0xff]
  %v20 = vld [vmem:[%s0 + $0x30] sm:$0xff]
  %v21 = vld [vmem:[%s0 + $0x38] sm:$0xff]
  %v22 = vadd.f32 %v14, %v15
  %23 = vadd.xlane.f32.xlu0 %v22
  %v24 = vpop.xlane.xlu0 %23
  %v25 = vadd.f32 %v16, %v17
  %26 = vadd.xlane.f32.xlu0 %v25
  %v27 = vpop.xlane.xlu0 %26
  %v28 = vadd.f32 %v18, %v19
  %29 = vadd.xlane.f32.xlu0 %v28
  %v30 = vpop.xlane.xlu0 %29
  %v31 = vadd.f32 %v20, %v21
  %32 = vadd.xlane.f32.xlu0 %v31
  %v33 = vpop.xlane.xlu0 %32
  %v34 = vmul.f32 %v24, 0.00390625
  %v35 = vmul.f32 %v27, 0.00390625
  %v36 = vmul.f32 %v30, 0.00390625
  %v37 = vmul.f32 %v33, 0.00390625
  %v38 = vld [vmem:[%s2] sm:$0x1]
  %v39 = vld [vmem:[%s2 + $0x1] sm:$0x1]
  %v40 = vld [vmem:[%s2 + $0x2] sm:$0xff]
  %v41 = vld [vmem:[%s2 + $0xa] sm:$0xff]
  %v42 = vld [vmem:[%s2 + $0x12] sm:$0x1]
  %v43 = vld [vmem:[%s2 + $0x13] sm:$0xf]
  %v44 = vld [vmem:[%s2 + $0x17] sm:$0x1]
  %v45 = vlaneseq
  %v46 = vshrl.u32 %v45, 7
  %v47 = vsub.s32 0, %v46
  %v48 = vrot.slane %v38, %v47
  %51 = vbcast.lane.b32.xlu0 %v48, 256
  %v52 = vpop.permute.xlu0 %51
  %s54 = sor.u32 256, 8
  %55 = vbcast.lane.b32.xlu0 %v48, %s54
  %v56 = vpop.permute.xlu0 %55
  %v59 = vmul.f32 %v34, %v52
  %v60 = vmul.f32 %v35, %v56
  %v61 = vmul.f32 %v36, %v52
  %v62 = vmul.f32 %v37, %v56
  %65 = vset.pattern.permute.xlu0 0
  %66 = vperm.xlu0 %65, %v59
  %v67 = vpop.permute.xlu0 %66
  %68 = vset.pattern.permute.xlu0 0
  %69 = vperm.xlu0 %68, %v61
  %v70 = vpop.permute.xlu0 %69
  %v71 = vlaneseq
  %v72 = vand.u32 %v71, 127
  %v73 = vlaneseq
  %v74 = vshrl.u32 %v73, 7
  %v75 = vsub.s32 %v72, %v74
  %v76 = vrot.slane %v67, %v75
  %v77 = vlaneseq
  %v78 = vshrl.u32 %v77, 7
  %v79 = vsub.s32 %v72, %v78
  %v80 = vrot.slane %v70, %v79
  %vm81 = vcmask 1041409
  %v82 = vsel %vm81, %v80, %v76
  %vm84 = vcmask 25600
  %v85 = vsel %vm84, %v82, 0.0
  %86 = vadd.xlane.f32.xlu0 %v85
  %v87 = vpop.xlane.xlu0 %86
  %v88 = vadd.s32 %v72, 4
  %v89 = vlaneseq
  %v90 = vshrl.u32 %v89, 7
  %v91 = vsub.s32 %v88, %v90
  %v92 = vrot.slane %v67, %v91
  %v93 = vlaneseq
  %v94 = vshrl.u32 %v93, 7
  %v95 = vsub.s32 %v88, %v94
  %v96 = vrot.slane %v70, %v95
  %v97 = vsel %vm81, %v96, %v92
  %v99 = vsel %vm84, %v97, 0.0
  %100 = vadd.xlane.f32.xlu0 %v99
  %v101 = vpop.xlane.xlu0 %100
  %104 = vset.pattern.permute.xlu0 0
  %105 = vperm.xlu0 %104, %v60
  %v106 = vpop.permute.xlu0 %105
  %107 = vset.pattern.permute.xlu0 0
  %108 = vperm.xlu0 %107, %v62
  %v109 = vpop.permute.xlu0 %108
  %v110 = vlaneseq
  %v111 = vshrl.u32 %v110, 7
  %v112 = vsub.s32 %v72, %v111
  %v113 = vrot.slane %v106, %v112
  %v114 = vlaneseq
  %v115 = vshrl.u32 %v114, 7
  %v116 = vsub.s32 %v72, %v115
  %v117 = vrot.slane %v109, %v116
  %v118 = vsel %vm81, %v117, %v113
  %v120 = vsel %vm84, %v118, 0.0
  %121 = vadd.xlane.f32.xlu0 %v120
  %v122 = vpop.xlane.xlu0 %121
  %v123 = vlaneseq
  %v124 = vshrl.u32 %v123, 7
  %v125 = vsub.s32 %v88, %v124
  %v126 = vrot.slane %v106, %v125
  %v127 = vlaneseq
  %v128 = vshrl.u32 %v127, 7
  %v129 = vsub.s32 %v88, %v128
  %v130 = vrot.slane %v109, %v129
  %v131 = vsel %vm81, %v130, %v126
  %v133 = vsel %vm84, %v131, 0.0
  %134 = vadd.xlane.f32.xlu0 %v133
  %v135 = vpop.xlane.xlu0 %134
  %vm136 = vcmask 7168
  %v137 = vsel %vm136, %v87, %v101
  %vm138 = vcmask 15360
  %v139 = vsel %vm138, %v137, %v122
  %vm140 = vcmask 23552
  %v141 = vsel %vm140, %v139, %v135
  %v142 = vlaneseq
  %v143 = vshrl.u32 %v142, 7
  %v144 = vsub.s32 0, %v143
  %v145 = vrot.slane %v39, %v144
  %v146 = vadd.f32 %v141, %v145
  %v149 = vunpack.c.l.s4 1966171168
  %v150 = vunpack.c.0.s8 %v149
  %v151 = vlaneseq
  %v152 = vshrl.u32 %v151, 7
  %v153 = vsub.s32 %v150, %v152
  %v154 = vrot.slane %v146, %v153
  %v155 = vcombine.high %v154, %v154
  %v157 = vunpack.c.l.s4 1966171168
  %v158 = vunpack.c.0.s8 %v157
  %v159 = vlaneseq
  %v160 = vshrl.u32 %v159, 7
  %v161 = vsub.s32 %v158, %v160
  %v162 = vrot.slane %v154, %v161
  %v164 = vunpack.c.l.s4 1966171168
  %v165 = vunpack.c.0.s8 %v164
  %v166 = vlaneseq
  %v167 = vshrl.u32 %v166, 7
  %v168 = vsub.s32 %v165, %v167
  %v169 = vrot.slane %v155, %v168
  %v170 = vlaneseq
  %v171 = vshrl.u32 %v170, 7
  %v172 = vsub.s32 0, %v171
  %v173 = vrot.slane %v162, %v172
  %v174 = vlaneseq
  %v175 = vshrl.u32 %v174, 7
  %v176 = vsub.s32 0, %v175
  %v177 = vrot.slane %v169, %v176
  %v180 = vmul.f32 %v173, %v40
  %v181 = vmul.f32 %v173, %v41
  %v182 = vmul.f32 %v177, %v40
  %v183 = vmul.f32 %v177, %v41
  %vm184 = vcmask 31744
  %v185 = vsel %vm184, %v180, 0.0
  %186 = vadd.xlane.f32.xlu0 %v185
  %v187 = vpop.xlane.xlu0 %186
  %v188 = vsel %vm184, %v181, 0.0
  %189 = vadd.xlane.f32.xlu0 %v188
  %v190 = vpop.xlane.xlu0 %189
  %v191 = vsel %vm184, %v182, 0.0
  %192 = vadd.xlane.f32.xlu0 %v191
  %v193 = vpop.xlane.xlu0 %192
  %v194 = vsel %vm184, %v183, 0.0
  %195 = vadd.xlane.f32.xlu0 %v194
  %v196 = vpop.xlane.xlu0 %195
  %v197 = vlaneseq
  %v198 = vshrl.u32 %v197, 7
  %v199 = vsub.s32 0, %v198
  %v200 = vrot.slane %v42, %v199
  %203 = vbcast.lane.b32.xlu0 %v200, 256
  %v204 = vpop.permute.xlu0 %203
  %s206 = sor.u32 256, 8
  %207 = vbcast.lane.b32.xlu0 %v200, %s206
  %v208 = vpop.permute.xlu0 %207
  %v211 = vadd.f32 %v187, %v204
  %v212 = vadd.f32 %v190, %v208
  %v213 = vadd.f32 %v193, %v204
  %v214 = vadd.f32 %v196, %v208
  %v215 = vmul.f32 %v211, 0.5
  %v216 = vmul.f32 %v212, 0.5
  %v217 = vmul.f32 %v213, 0.5
  %v218 = vmul.f32 %v214, 0.5
  %v219 = vmul.f32 %v211, 0.70710677
  %v220 = vmul.f32 %v212, 0.70710677
  %v221 = vmul.f32 %v213, 0.70710677
  %v222 = vmul.f32 %v214, 0.70710677
  %vm223 = vcmp.ge.f32.partialorder %v219, 0.0
  %vm224 = vcmp.ge.f32.partialorder %v220, 0.0
  %vm225 = vcmp.ge.f32.partialorder %v221, 0.0
  %vm226 = vcmp.ge.f32.partialorder %v222, 0.0
  %v227 = vsel %vm223, 1.0, -1.0
  %v228 = vsel %vm224, 1.0, -1.0
  %v229 = vsel %vm225, 1.0, -1.0
  %v230 = vsel %vm226, 1.0, -1.0
  %v231 = vand.u32 2147483647, %v219
  %v232 = vand.u32 2147483647, %v220
  %v233 = vand.u32 2147483647, %v221
  %v234 = vand.u32 2147483647, %v222
  %v235 = vmul.f32 %v231, 0.3275911
  %v236 = vmul.f32 %v232, 0.3275911
  %v237 = vmul.f32 %v233, 0.3275911
  %v238 = vmul.f32 %v234, 0.3275911
  %v239 = vadd.f32 %v235, 1.0
  %v240 = vadd.f32 %v236, 1.0
  %v241 = vadd.f32 %v237, 1.0
  %v242 = vadd.f32 %v238, 1.0
  %v243 = vrcp.pop %v239
  %v244 = vmul.f32 1.0, %v243
  %v245 = vrcp.pop %v240
  %v246 = vmul.f32 1.0, %v245
  %v247 = vrcp.pop %v241
  %v248 = vmul.f32 1.0, %v247
  %v249 = vrcp.pop %v242
  %v250 = vmul.f32 1.0, %v249
  %v251 = vmul.f32 %v244, 1.0614054
  %v252 = vmul.f32 %v246, 1.0614054
  %v253 = vmul.f32 %v248, 1.0614054
  %v254 = vmul.f32 %v250, 1.0614054
  %v255 = vadd.f32 %v251, -1.4531521
  %v256 = vadd.f32 %v252, -1.4531521
  %v257 = vadd.f32 %v253, -1.4531521
  %v258 = vadd.f32 %v254, -1.4531521
  %v259 = vmul.f32 %v255, %v244
  %v260 = vmul.f32 %v256, %v246
  %v261 = vmul.f32 %v257, %v248
  %v262 = vmul.f32 %v258, %v250
  %v263 = vadd.f32 %v259, 1.4214138
  %v264 = vadd.f32 %v260, 1.4214138
  %v265 = vadd.f32 %v261, 1.4214138
  %v266 = vadd.f32 %v262, 1.4214138
  %v267 = vmul.f32 %v263, %v244
  %v268 = vmul.f32 %v264, %v246
  %v269 = vmul.f32 %v265, %v248
  %v270 = vmul.f32 %v266, %v250
  %v271 = vadd.f32 %v267, -0.28449672
  %v272 = vadd.f32 %v268, -0.28449672
  %v273 = vadd.f32 %v269, -0.28449672
  %v274 = vadd.f32 %v270, -0.28449672
  %v275 = vmul.f32 %v271, %v244
  %v276 = vmul.f32 %v272, %v246
  %v277 = vmul.f32 %v273, %v248
  %v278 = vmul.f32 %v274, %v250
  %v279 = vadd.f32 %v275, 0.2548296
  %v280 = vadd.f32 %v276, 0.2548296
  %v281 = vadd.f32 %v277, 0.2548296
  %v282 = vadd.f32 %v278, 0.2548296
  %v283 = vmul.f32 %v279, %v244
  %v284 = vmul.f32 %v280, %v246
  %v285 = vmul.f32 %v281, %v248
  %v286 = vmul.f32 %v282, %v250
  %v287 = vsub.f32 0.0, %v231
  %v288 = vsub.f32 0.0, %v232
  %v289 = vsub.f32 0.0, %v233
  %v290 = vsub.f32 0.0, %v234
  %v291 = vmul.f32 %v287, %v231
  %v292 = vmul.f32 %v288, %v232
  %v293 = vmul.f32 %v289, %v233
  %v294 = vmul.f32 %v290, %v234
  %v295 = vmul.f32 %v291, 1.442695
  %v296 = vpow.pop %v295
  %v297 = vmul.f32 %v292, 1.442695
  %v298 = vpow.pop %v297
  %v299 = vmul.f32 %v293, 1.442695
  %v300 = vpow.pop %v299
  %v301 = vmul.f32 %v294, 1.442695
  %v302 = vpow.pop %v301
  %v303 = vmul.f32 %v283, %v296
  %v304 = vmul.f32 %v284, %v298
  %v305 = vmul.f32 %v285, %v300
  %v306 = vmul.f32 %v286, %v302
  %v307 = vsub.f32 1.0, %v303
  %v308 = vsub.f32 1.0, %v304
  %v309 = vsub.f32 1.0, %v305
  %v310 = vsub.f32 1.0, %v306
  %v311 = vmul.f32 %v227, %v307
  %v312 = vmul.f32 %v228, %v308
  %v313 = vmul.f32 %v229, %v309
  %v314 = vmul.f32 %v230, %v310
  %v315 = vadd.f32 %v311, 1.0
  %v316 = vadd.f32 %v312, 1.0
  %v317 = vadd.f32 %v313, 1.0
  %v318 = vadd.f32 %v314, 1.0
  %v319 = vmul.f32 %v215, %v315
  %v320 = vmul.f32 %v216, %v316
  %v321 = vmul.f32 %v217, %v317
  %v322 = vmul.f32 %v218, %v318
  %v324 = vlaneseq
  %v325 = vshrl.u32 %v324, 7
  %v326 = vsub.s32 0, %v325
  %v327 = vrot.slane %v43, %v326
  %329 = vbcast.lane.b32.xlu0 %v327, 256
  %v330 = vpop.permute.xlu0 %329
  %s332 = sor.u32 256, 8
  %333 = vbcast.lane.b32.xlu0 %v327, %s332
  %v334 = vpop.permute.xlu0 %333
  %v335 = vlaneseq
  %v336 = vshrl.u32 %v335, 7
  %v337 = vsub.s32 1, %v336
  %v338 = vrot.slane %v43, %v337
  %340 = vbcast.lane.b32.xlu0 %v338, 256
  %v341 = vpop.permute.xlu0 %340
  %s343 = sor.u32 256, 8
  %344 = vbcast.lane.b32.xlu0 %v338, %s343
  %v345 = vpop.permute.xlu0 %344
  %v346 = vlaneseq
  %v347 = vshrl.u32 %v346, 7
  %v348 = vsub.s32 2, %v347
  %v349 = vrot.slane %v43, %v348
  %351 = vbcast.lane.b32.xlu0 %v349, 256
  %v352 = vpop.permute.xlu0 %351
  %s354 = sor.u32 256, 8
  %355 = vbcast.lane.b32.xlu0 %v349, %s354
  %v356 = vpop.permute.xlu0 %355
  %v357 = vlaneseq
  %v358 = vshrl.u32 %v357, 7
  %v359 = vsub.s32 3, %v358
  %v360 = vrot.slane %v43, %v359
  %362 = vbcast.lane.b32.xlu0 %v360, 256
  %v363 = vpop.permute.xlu0 %362
  %s365 = sor.u32 256, 8
  %366 = vbcast.lane.b32.xlu0 %v360, %s365
  %v367 = vpop.permute.xlu0 %366
  %v376 = vmul.f32 %v319, %v330
  %v377 = vmul.f32 %v320, %v334
  %v378 = vmul.f32 %v319, %v341
  %v379 = vmul.f32 %v320, %v345
  %v380 = vmul.f32 %v319, %v352
  %v381 = vmul.f32 %v320, %v356
  %v382 = vmul.f32 %v319, %v363
  %v383 = vmul.f32 %v320, %v367
  %v384 = vmul.f32 %v321, %v330
  %v385 = vmul.f32 %v322, %v334
  %v386 = vmul.f32 %v321, %v341
  %v387 = vmul.f32 %v322, %v345
  %v388 = vmul.f32 %v321, %v352
  %v389 = vmul.f32 %v322, %v356
  %v390 = vmul.f32 %v321, %v363
  %v391 = vmul.f32 %v322, %v367
  %408 = vset.pattern.permute.xlu0 0
  %409 = vperm.xlu0 %408, %v376
  %v410 = vpop.permute.xlu0 %409
  %411 = vset.pattern.permute.xlu0 0
  %412 = vperm.xlu0 %411, %v377
  %v413 = vpop.permute.xlu0 %412
  %414 = vset.pattern.permute.xlu0 0
  %415 = vperm.xlu0 %414, %v378
  %v416 = vpop.permute.xlu0 %415
  %417 = vset.pattern.permute.xlu0 0
  %418 = vperm.xlu0 %417, %v379
  %v419 = vpop.permute.xlu0 %418
  %420 = vset.pattern.permute.xlu0 0
  %421 = vperm.xlu0 %420, %v380
  %v422 = vpop.permute.xlu0 %421
  %423 = vset.pattern.permute.xlu0 0
  %424 = vperm.xlu0 %423, %v381
  %v425 = vpop.permute.xlu0 %424
  %426 = vset.pattern.permute.xlu0 0
  %427 = vperm.xlu0 %426, %v382
  %v428 = vpop.permute.xlu0 %427
  %429 = vset.pattern.permute.xlu0 0
  %430 = vperm.xlu0 %429, %v383
  %v431 = vpop.permute.xlu0 %430
  %432 = vset.pattern.permute.xlu0 0
  %433 = vperm.xlu0 %432, %v384
  %v434 = vpop.permute.xlu0 %433
  %435 = vset.pattern.permute.xlu0 0
  %436 = vperm.xlu0 %435, %v385
  %v437 = vpop.permute.xlu0 %436
  %438 = vset.pattern.permute.xlu0 0
  %439 = vperm.xlu0 %438, %v386
  %v440 = vpop.permute.xlu0 %439
  %441 = vset.pattern.permute.xlu0 0
  %442 = vperm.xlu0 %441, %v387
  %v443 = vpop.permute.xlu0 %442
  %444 = vset.pattern.permute.xlu0 0
  %445 = vperm.xlu0 %444, %v388
  %v446 = vpop.permute.xlu0 %445
  %447 = vset.pattern.permute.xlu0 0
  %448 = vperm.xlu0 %447, %v389
  %v449 = vpop.permute.xlu0 %448
  %450 = vset.pattern.permute.xlu0 0
  %451 = vperm.xlu0 %450, %v390
  %v452 = vpop.permute.xlu0 %451
  %453 = vset.pattern.permute.xlu0 0
  %454 = vperm.xlu0 %453, %v391
  %v455 = vpop.permute.xlu0 %454
  %v456 = vlaneseq
  %v457 = vshrl.u32 %v456, 7
  %v458 = vsub.s32 %v72, %v457
  %v459 = vrot.slane %v410, %v458
  %v460 = vadd.s32 %v72, 4294967288
  %v461 = vlaneseq
  %v462 = vshrl.u32 %v461, 7
  %v463 = vsub.s32 %v460, %v462
  %v464 = vrot.slane %v413, %v463
  %vm465 = vcmask 130112
  %v466 = vsel %vm465, %v464, %v459
  %v467 = vlaneseq
  %v468 = vshrl.u32 %v467, 7
  %v469 = vsub.s32 %v72, %v468
  %v470 = vrot.slane %v416, %v469
  %v471 = vlaneseq
  %v472 = vshrl.u32 %v471, 7
  %v473 = vsub.s32 %v460, %v472
  %v474 = vrot.slane %v419, %v473
  %v475 = vsel %vm465, %v474, %v470
  %v476 = vlaneseq
  %v477 = vshrl.u32 %v476, 7
  %v478 = vsub.s32 %v72, %v477
  %v479 = vrot.slane %v422, %v478
  %v480 = vlaneseq
  %v481 = vshrl.u32 %v480, 7
  %v482 = vsub.s32 %v460, %v481
  %v483 = vrot.slane %v425, %v482
  %v484 = vsel %vm465, %v483, %v479
  %v485 = vlaneseq
  %v486 = vshrl.u32 %v485, 7
  %v487 = vsub.s32 %v72, %v486
  %v488 = vrot.slane %v428, %v487
  %v489 = vlaneseq
  %v490 = vshrl.u32 %v489, 7
  %v491 = vsub.s32 %v460, %v490
  %v492 = vrot.slane %v431, %v491
  %v493 = vsel %vm465, %v492, %v488
  %v494 = vlaneseq
  %v495 = vshrl.u32 %v494, 7
  %v496 = vsub.s32 %v72, %v495
  %v497 = vrot.slane %v434, %v496
  %v498 = vlaneseq
  %v499 = vshrl.u32 %v498, 7
  %v500 = vsub.s32 %v460, %v499
  %v501 = vrot.slane %v437, %v500
  %v502 = vsel %vm465, %v501, %v497
  %v503 = vlaneseq
  %v504 = vshrl.u32 %v503, 7
  %v505 = vsub.s32 %v72, %v504
  %v506 = vrot.slane %v440, %v505
  %v507 = vlaneseq
  %v508 = vshrl.u32 %v507, 7
  %v509 = vsub.s32 %v460, %v508
  %v510 = vrot.slane %v443, %v509
  %v511 = vsel %vm465, %v510, %v506
  %v512 = vlaneseq
  %v513 = vshrl.u32 %v512, 7
  %v514 = vsub.s32 %v72, %v513
  %v515 = vrot.slane %v446, %v514
  %v516 = vlaneseq
  %v517 = vshrl.u32 %v516, 7
  %v518 = vsub.s32 %v460, %v517
  %v519 = vrot.slane %v449, %v518
  %v520 = vsel %vm465, %v519, %v515
  %v521 = vlaneseq
  %v522 = vshrl.u32 %v521, 7
  %v523 = vsub.s32 %v72, %v522
  %v524 = vrot.slane %v452, %v523
  %v525 = vlaneseq
  %v526 = vshrl.u32 %v525, 7
  %v527 = vsub.s32 %v460, %v526
  %v528 = vrot.slane %v455, %v527
  %v529 = vsel %vm465, %v528, %v524
  %v530 = vsel %vm81, %v475, %v466
  %vm531 = vcmask 1042434
  %v532 = vsel %vm531, %v484, %v530
  %vm533 = vcmask 1043459
  %v534 = vsel %vm533, %v493, %v532
  %v535 = vsel %vm81, %v511, %v502
  %v536 = vsel %vm531, %v520, %v535
  %v537 = vsel %vm533, %v529, %v536
  %vm540 = vcmask 125952
  %v541 = vsel %vm540, %v534, 0.0
  %542 = vadd.xlane.f32.xlu0 %v541
  %v543 = vpop.xlane.xlu0 %542
  %v544 = vsel %vm540, %v537, 0.0
  %545 = vadd.xlane.f32.xlu0 %v544
  %v546 = vpop.xlane.xlu0 %545
  %v547 = vlaneseq
  %v548 = vshrl.u32 %v547, 7
  %v549 = vsub.s32 0, %v548
  %v550 = vrot.slane %v44, %v549
  %553 = vbcast.lane.b32.xlu0 %v550, 256
  %v554 = vpop.permute.xlu0 %553
  %v556 = vadd.f32 %v543, %v554
  %v557 = vadd.f32 %v546, %v554
  %v558 = vxor.u32 %v556, 2147483648
  %v559 = vxor.u32 %v557, 2147483648
  %v560 = vmul.f32 %v558, 1.442695
  %v561 = vpow.pop %v560
  %v562 = vmul.f32 %v559, 1.442695
  %v563 = vpow.pop %v562
  %v564 = vadd.f32 %v561, 1.0
  %v565 = vadd.f32 %v563, 1.0
  %v566 = vrcp.pop %v564
  %v567 = vmul.f32 1.0, %v566
  %v568 = vrcp.pop %v565
  %v569 = vmul.f32 1.0, %v568
  %v570 = vld [vmem:[%s1] sm:$0xf]
  %v571 = vadd.s32 %v72, 128
  %vm572 = vcmp.ge.s32.totalorder %v72, 0
  %vm573 = vcmp.ge.s32.totalorder %v571, 0
  %vm574 = vcmp.lt.s32.totalorder %v72, 36
  %vm575 = vcmp.lt.s32.totalorder %v571, 36
  %vm576 = vmand %vm572, %vm574
  %vm577 = vmand %vm573, %vm575
  %v578 = vlaneseq
  %v579 = vshrl.u32 %v578, 7
  %v580 = vsub.s32 0, %v579
  %v581 = vrot.slane %v567, %v580
  %v582 = vlaneseq
  %v583 = vshrl.u32 %v582, 7
  %v584 = vsub.s32 0, %v583
  %v585 = vrot.slane %v569, %v584
  %588 = vset.pattern.permute.xlu0 0
  %589 = vperm.xlu0 %588, %v581
  %v590 = vpop.permute.xlu0 %589
  %591 = vset.pattern.permute.xlu0 0
  %592 = vperm.xlu0 %591, %v585
  %v593 = vpop.permute.xlu0 %592
  %v594 = vsel %vm81, %v593, %v590
  %v596 = vsel %vm576, %v594, 0.0
  %v597 = vsel %vm577, %v594, 0.0
  %vm598 = vcmp.ge.s32.totalorder %v72, 36
  %vm599 = vcmp.ge.s32.totalorder %v571, 36
  %vm600 = vcmp.lt.s32.totalorder %v72, 72
  %vm601 = vcmp.lt.s32.totalorder %v571, 72
  %vm602 = vmand %vm598, %vm600
  %vm603 = vmand %vm599, %vm601
  %v604 = vlaneseq
  %v605 = vshrl.u32 %v604, 7
  %v606 = vsub.s32 1, %v605
  %v607 = vrot.slane %v567, %v606
  %v608 = vlaneseq
  %v609 = vshrl.u32 %v608, 7
  %v610 = vsub.s32 1, %v609
  %v611 = vrot.slane %v569, %v610
  %614 = vset.pattern.permute.xlu0 0
  %615 = vperm.xlu0 %614, %v607
  %v616 = vpop.permute.xlu0 %615
  %617 = vset.pattern.permute.xlu0 0
  %618 = vperm.xlu0 %617, %v611
  %v619 = vpop.permute.xlu0 %618
  %v620 = vsel %vm81, %v619, %v616
  %v622 = vsel %vm602, %v620, %v596
  %v623 = vsel %vm603, %v620, %v597
  %vm624 = vcmp.ge.s32.totalorder %v72, 72
  %vm625 = vcmp.ge.s32.totalorder %v571, 72
  %vm626 = vcmp.lt.s32.totalorder %v72, 108
  %vm627 = vcmp.lt.s32.totalorder %v571, 108
  %vm628 = vmand %vm624, %vm626
  %vm629 = vmand %vm625, %vm627
  %v630 = vlaneseq
  %v631 = vshrl.u32 %v630, 7
  %v632 = vsub.s32 2, %v631
  %v633 = vrot.slane %v567, %v632
  %v634 = vlaneseq
  %v635 = vshrl.u32 %v634, 7
  %v636 = vsub.s32 2, %v635
  %v637 = vrot.slane %v569, %v636
  %640 = vset.pattern.permute.xlu0 0
  %641 = vperm.xlu0 %640, %v633
  %v642 = vpop.permute.xlu0 %641
  %643 = vset.pattern.permute.xlu0 0
  %644 = vperm.xlu0 %643, %v637
  %v645 = vpop.permute.xlu0 %644
  %v646 = vsel %vm81, %v645, %v642
  %v648 = vsel %vm628, %v646, %v622
  %v649 = vsel %vm629, %v646, %v623
  %vm650 = vcmp.ge.s32.totalorder %v72, 108
  %vm651 = vcmp.ge.s32.totalorder %v571, 108
  %vm652 = vcmp.lt.s32.totalorder %v72, 144
  %vm653 = vcmp.lt.s32.totalorder %v571, 144
  %vm654 = vmand %vm650, %vm652
  %vm655 = vmand %vm651, %vm653
  %v656 = vlaneseq
  %v657 = vshrl.u32 %v656, 7
  %v658 = vsub.s32 3, %v657
  %v659 = vrot.slane %v567, %v658
  %v660 = vlaneseq
  %v661 = vshrl.u32 %v660, 7
  %v662 = vsub.s32 3, %v661
  %v663 = vrot.slane %v569, %v662
  %666 = vset.pattern.permute.xlu0 0
  %667 = vperm.xlu0 %666, %v659
  %v668 = vpop.permute.xlu0 %667
  %669 = vset.pattern.permute.xlu0 0
  %670 = vperm.xlu0 %669, %v663
  %v671 = vpop.permute.xlu0 %670
  %v672 = vsel %vm81, %v671, %v668
  %v674 = vsel %vm654, %v672, %v648
  %v675 = vsel %vm655, %v672, %v649
  %v678 = vunpack.c.l.s4 1983009808
  %v679 = vunpack.c.0.s8 %v678
  %v680 = vlaneseq
  %v681 = vshrl.u32 %v680, 7
  %v682 = vsub.s32 %v679, %v681
  %v683 = vrot.slane %v570, %v682
  %v684 = vcombine.high %v683, %v683
  %v687 = vmul.f32 %v674, %v683
  %v688 = vmul.f32 %v675, %v684
  %v691 = vcombine.low %v687, %v688
  %v693 = vunpack.c.l.s4 1983009808
  %v694 = vunpack.c.0.s8 %v693
  %v695 = vlaneseq
  %v696 = vshrl.u32 %v695, 7
  %v697 = vsub.s32 %v694, %v696
  %v698 = vrot.slane %v691, %v697
  %vm700 = vcmask 1041408
  %vm701 = vcmask 125954
  %vm702 = vmor %vm701, %vm700
  %703 = vst.msk [vmem:[%s3] sm:$0xf] %vm702, %v698
  // Predicated region
  $region14: #{win_kernel_reweight.1} parent=0 // pred_check
    _
  $region15: #{win_kernel_reweight.1} parent=0 // pred_check_branch
    %705 = sbr.rel (0) target = $region17
  $region16: #{win_kernel_reweight.1} parent=0 // pred_region
    _
  $region17: #{win_kernel_reweight.1} parent=0 // pred_fallthru
    _
  // Predicated region
  $region18: #{win_kernel_reweight.1} parent=0 // pred_check
    _
  $region19: #{win_kernel_reweight.1} parent=0 // pred_check_branch
    %707 = sbr.rel (0) target = $region21
  $region20: #{win_kernel_reweight.1} parent=0 // pred_region
    _
  $region21: #{win_kernel_reweight.1} parent=0 // pred_fallthru
    _

</llo_original>
